<compile_context>
chip_gen: v6e
topology: v6e:2x2x1
jax: 0.10.0
libtpu: 0.0.40
codegen_flags: <defaults>
</compile_context>

<pallas_src>
import functools

import jax
import jax.numpy as jnp
from jax.experimental import pallas as pl
from jax.experimental.pallas import tpu as pltpu


def _ffn_kernel(x_ref, w1_ref, b1_ref, w2_ref, b2_ref, o_ref, acc_ref):
    # x_ref: (tm, C), w1_ref: (C, th), b1_ref: (1, th),
    # w2_ref: (th, C), b2_ref: (1, C), o_ref: (tm, C), acc_ref: (tm, C) f32.
    h_idx = pl.program_id(1)

    @pl.when(h_idx == 0)
    def _init():
        acc_ref[...] = jnp.zeros_like(acc_ref)

    # First linear on this hidden chunk (MXU, f32 accumulation) + bias + ReLU.
    h = jnp.dot(x_ref[...], w1_ref[...], preferred_element_type=jnp.float32)
    h = jnp.maximum(h + b1_ref[...].astype(jnp.float32), 0.0)

    # Second linear: this hidden chunk's partial contribution, accumulated in VMEM.
    acc_ref[...] += jnp.dot(h.astype(w2_ref.dtype), w2_ref[...],
                            preferred_element_type=jnp.float32)

    @pl.when(h_idx == pl.num_programs(1) - 1)
    def _finalize():
        y = acc_ref[...] + b2_ref[...].astype(jnp.float32)
        # Dropout(p=0.2) in eval mode == identity.
        o_ref[...] = y.astype(o_ref.dtype)


def _round_up(a, b):
    return (a + b - 1) // b * b


def _cdiv(a, b):
    return -(-a // b)


def _vmem_budget_bytes():
    """Generation-aware VMEM limit: physical capacity minus headroom, capped."""
    try:
        cap = int(pltpu.get_tpu_info().vmem_capacity_bytes)
    except Exception:
        cap = 64 * 1024 * 1024  # conservative fallback (safe on every generation)
    # ~20 MiB headroom for compiler-internal scratch / semaphores / pipelining slack.
    return max(32 * 1024 * 1024, min(cap - 20 * 1024 * 1024, 100 * 1024 * 1024))


def _choose_tiles(M, C, H, block_m, block_h, in_itemsize, out_itemsize, budget):
    """Pick (tm, th) respecting lane/sublane alignment, megacore and the VMEM budget."""
    align = 16 if in_itemsize <= 2 else 8  # bf16 packs 2 rows per sublane

    # Hidden-tile candidates: multiples of 128 that divide H, largest first.
    th_cands = [c for c in (1024, 512, 256, 128) if H % c == 0]
    if block_h is not None:
        bh = max(128, (int(block_h) // 128) * 128)  # round to a multiple of 128
        if H % bh == 0:
            th_cands = [bh] + [c for c in th_cands if c < bh]
    if not th_cands:
        th_cands = [H]  # full hidden dim (always legal as a block dim)

    # Row tile: big default for arithmetic intensity, aligned, never bigger than M_pad.
    tm = min(int(block_m), _round_up(M, align))
    tm = max(align, _round_up(tm, align))
    # Guarantee >=2 row tiles when possible so the "parallel" M axis feeds both cores.
    if _cdiv(M, tm) < 2 and tm > align:
        tm_half = max(align, _round_up(_cdiv(tm, 2), align))
        if tm_half < tm:
            tm = tm_half

    def usage(tm_, th_):
        ins = tm_ * C + C * th_ + th_ * C + th_ + C          # x, w1, w2, b1, b2
        outs = tm_ * C
        # x2 for double buffering of pipelined inputs/outputs + f32 accumulator.
        return 2 * (ins * in_itemsize + outs * out_itemsize) + tm_ * C * 4

    th = th_cands[0]
    fit_budget = int(budget * 0.85)  # slack: the usage model is approximate
    while usage(tm, th) > fit_budget:
        smaller = [c for c in th_cands if c < th]
        if smaller:
            th = smaller[0]
        elif tm > align:
            tm = max(align, _round_up(tm // 2, align))
        else:
            break
    return tm, th


@functools.partial(jax.jit, static_argnames=("block_m", "block_h", "compute_dtype"))
def feed_forward(x, w1, b1, w2, b2, *, block_m=512, block_h=None,
                 compute_dtype=jnp.bfloat16):
    """GPT-1 FFN: Dropout(ReLU(x @ W1 + b1) @ W2 + b2), dropout in eval mode.

    x: (B, T, C).  w1: (C, 4C), b1: (1, 4C), w2: (4C, C), b2: (1, C).
    compute_dtype: operand dtype inside the kernel (default bf16 = native MXU fast
    path); accumulation is always f32, output keeps x's original dtype.
    """
    B, T, C = x.shape
    H = w1.shape[1]
    out_dtype = x.dtype

    if compute_dtype is not None and jnp.dtype(compute_dtype) != jnp.dtype(x.dtype):
        x = x.astype(compute_dtype)
    if compute_dtype is not None:
        w1 = w1.astype(compute_dtype)
        b1 = b1.astype(compute_dtype)
        w2 = w2.astype(compute_dtype)
        b2 = b2.astype(compute_dtype)

    M = B * T
    x2d = x.reshape(M, C)

    in_itemsize = jnp.dtype(x2d.dtype).itemsize
    out_itemsize = jnp.dtype(out_dtype).itemsize
    vmem_budget = _vmem_budget_bytes()

    tm, th = _choose_tiles(M, C, H, block_m, block_h, in_itemsize, out_itemsize,
                           vmem_budget)

    # Pad M so M_pad % tm == 0; the extra rows are sliced off afterwards.
    M_pad = _round_up(M, tm)
    if M_pad != M:
        x2d = jnp.pad(x2d, ((0, M_pad - M), (0, 0)))

    grid = (M_pad // tm, H // th)
    n_row_tiles = grid[0]

    flops = 4 * M_pad * C * H  # two matmuls, mul+add each
    bytes_accessed = (
        x2d.size * in_itemsize
        + M_pad * C * out_itemsize
        # Weights are re-streamed from HBM once per row tile.
        + n_row_tiles * (w1.size + w2.size) * jnp.dtype(w1.dtype).itemsize
        + (b1.size + b2.size) * jnp.dtype(b1.dtype).itemsize
    )

    out2d = pl.pallas_call(
        _ffn_kernel,
        out_shape=jax.ShapeDtypeStruct((M_pad, C), out_dtype),
        grid_spec=pltpu.PrefetchScalarGridSpec(
            num_scalar_prefetch=0,
            grid=grid,
            in_specs=[
                pl.BlockSpec((tm, C), lambda i, j: (i, 0)),   # x row tile (resident over j)
                pl.BlockSpec((C, th), lambda i, j: (0, j)),   # W1 column tile
                pl.BlockSpec((1, th), lambda i, j: (0, j)),   # b1 tile
                pl.BlockSpec((th, C), lambda i, j: (j, 0)),   # W2 row tile
                pl.BlockSpec((1, C), lambda i, j: (0, 0)),    # b2 (resident)
            ],
            out_specs=pl.BlockSpec((tm, C), lambda i, j: (i, 0)),
            scratch_shapes=[pltpu.VMEM((tm, C), jnp.float32)],
        ),
        compiler_params=pltpu.CompilerParams(
            dimension_semantics=("parallel", "arbitrary"),
            vmem_limit_bytes=vmem_budget,
        ),
        cost_estimate=pl.CostEstimate(
            flops=flops, transcendentals=0, bytes_accessed=bytes_accessed),
    )(x2d, w1, b1, w2, b2)

    return out2d[:M].reshape(B, T, C)


def init_params(key, n_embd, dtype=jnp.float32):
    """Deterministic param init matching nn.Linear shapes (stored as (in, out))."""
    h = 4 * n_embd
    k1, k2, k3, k4 = jax.random.split(key, 4)
    # PyTorch nn.Linear default: U(-1/sqrt(fan_in), 1/sqrt(fan_in)).
    lim1 = 1.0 / (n_embd ** 0.5)
    lim2 = 1.0 / (h ** 0.5)
    w1 = jax.random.uniform(k1, (n_embd, h), dtype, minval=-lim1, maxval=lim1)
    b1 = jax.random.uniform(k2, (1, h), dtype, minval=-lim1, maxval=lim1)
    w2 = jax.random.uniform(k3, (h, n_embd), dtype, minval=-lim2, maxval=lim2)
    b2 = jax.random.uniform(k4, (1, n_embd), dtype, minval=-lim2, maxval=lim2)
    return w1, b1, w2, b2


if __name__ == "__main__":
    key = jax.random.PRNGKey(0)
    B, T, C = 2, 8, 128  # batch, seq, n_embd (lane-dense: C is a multiple of 128)

    kx, kp = jax.random.split(key)
    x = jax.random.normal(kx, (B, T, C), jnp.float32)
    w1, b1, w2, b2 = init_params(kp, C)

    # Reference in plain JAX (eval-mode dropout = identity).
    ref = jnp.maximum(x.reshape(-1, C) @ w1 + b1, 0.0) @ w2 + b2
    ref = ref.reshape(B, T, C)

    # 1) f32 compute path: strict parity with the reference.
    out_f32 = jax.block_until_ready(
        feed_forward(x, w1, b1, w2, b2, compute_dtype=jnp.float32))
    assert out_f32.shape == (B, T, C)
    assert jnp.allclose(out_f32, ref, atol=1e-4, rtol=1e-4)

    # 2) Default path (bf16 operands on the MXU fast path, f32 accumulation).
    out_bf16 = jax.block_until_ready(feed_forward(x, w1, b1, w2, b2))
    assert out_bf16.shape == (B, T, C)
    assert jnp.allclose(out_bf16, ref, atol=1e-1, rtol=1e-1)

    # 3) Larger M (500 rows): exercises >=2 row tiles ("parallel" axis / megacore),
    #    the H-reduction accumulator across 4 grid steps, and the pad/slice path.
    B2, T2 = 2, 250
    x2 = jax.random.normal(jax.random.PRNGKey(1), (B2, T2, C), jnp.float32)
    ref2 = (jnp.maximum(x2.reshape(-1, C) @ w1 + b1, 0.0) @ w2 + b2).reshape(B2, T2, C)
    out2 = jax.block_until_ready(
        feed_forward(x2, w1, b1, w2, b2, block_h=128, compute_dtype=jnp.float32))
    assert out2.shape == (B2, T2, C)
    assert jnp.allclose(out2, ref2, atol=1e-4, rtol=1e-4)

    print("KERNEL_OK")
</pallas_src>

<mosaic_0001>
module attributes {stable_mosaic.version = 11 : i64} {
  func.func @_ffn_kernel(%arg0: i32, %arg1: i32, %arg2: memref<8x128xf32, #tpu.memory_space<vmem>>, %arg3: memref<128x512xf32, #tpu.memory_space<vmem>>, %arg4: memref<1x512xf32, #tpu.memory_space<vmem>>, %arg5: memref<512x128xf32, #tpu.memory_space<vmem>>, %arg6: memref<1x128xf32, #tpu.memory_space<vmem>>, %arg7: memref<8x128xf32, #tpu.memory_space<vmem>>, %arg8: memref<8x128xf32, #tpu.memory_space<vmem>>) attributes {dimension_semantics = [#tpu.dimension_semantics<parallel>, #tpu.dimension_semantics<arbitrary>], iteration_bounds = array<i64: 2, 1>, scalar_prefetch = 0 : i64, scratch_operands = 1 : i64, tpu.core_type = #tpu.core_type<tc>, window_params = [{transform_indices = @transform_0, window_bounds = array<i64: 8, 128>}, {transform_indices = @transform_1, window_bounds = array<i64: 128, 512>}, {transform_indices = @transform_2, window_bounds = array<i64: 1, 512>}, {transform_indices = @transform_3, window_bounds = array<i64: 512, 128>}, {pipeline_mode = #tpu.pipeline_mode<synchronous>, transform_indices = @transform_4, window_bounds = array<i64: 1, 128>}, {transform_indices = @transform_5, window_bounds = array<i64: 8, 128>}]} {
    %c0_i32 = arith.constant 0 : i32
    %0 = arith.cmpi eq, %arg1, %c0_i32 : i32
    %1 = arith.extui %0 : i1 to i32
    %c0_i32_0 = arith.constant 0 : i32
    %2 = arith.cmpi ne, %1, %c0_i32_0 : i32
    scf.if %2 {
      %cst_16 = arith.constant 0.000000e+00 : f32
      %19 = vector.broadcast %cst_16 : f32 to vector<8x128xf32>
      %c0_17 = arith.constant 0 : index
      %c0_18 = arith.constant 0 : index
      %20 = vector.load %arg8[%c0_17, %c0_18] : memref<8x128xf32, #tpu.memory_space<vmem>>, vector<8x128xf32>
      tpu.vector_store %arg8[%c0_17, %c0_18], %19 {strides = array<i32>} : memref<8x128xf32, #tpu.memory_space<vmem>>, vector<8x128xf32>,
    } else {
    }
    %c0 = arith.constant 0 : index
    %c0_1 = arith.constant 0 : index
    %3 = vector.load %arg2[%c0, %c0_1] : memref<8x128xf32, #tpu.memory_space<vmem>>, vector<8x128xf32>
    %c0_2 = arith.constant 0 : index
    %c0_3 = arith.constant 0 : index
    %4 = vector.load %arg3[%c0_2, %c0_3] : memref<128x512xf32, #tpu.memory_space<vmem>>, vector<128x512xf32>
    %cst = arith.constant dense<0.000000e+00> : vector<8x512xf32>
    %5 = tpu.matmul %3, %4, %cst {dimension_numbers = #tpu.dot_dimension_numbers<[1], [0], [0], [1], [0, 0, 1, 1], [], []>} : vector<8x128xf32>, vector<128x512xf32>, vector<8x512xf32> -> vector<8x512xf32>
    %c0_4 = arith.constant 0 : index
    %c0_5 = arith.constant 0 : index
    %6 = vector.load %arg4[%c0_4, %c0_5] : memref<1x512xf32, #tpu.memory_space<vmem>>, vector<1x512xf32>
    %7 = vector.broadcast %6 : vector<1x512xf32> to vector<8x512xf32>
    %8 = arith.addf %5, %7 : vector<8x512xf32>
    %cst_6 = arith.constant 0.000000e+00 : f32
    %9 = vector.broadcast %cst_6 : f32 to vector<8x512xf32>
    %10 = arith.maximumf %8, %9 : vector<8x512xf32>
    %c0_7 = arith.constant 0 : index
    %c0_8 = arith.constant 0 : index
    %11 = vector.load %arg8[%c0_7, %c0_8] : memref<8x128xf32, #tpu.memory_space<vmem>>, vector<8x128xf32>
    %c0_9 = arith.constant 0 : index
    %c0_10 = arith.constant 0 : index
    %12 = vector.load %arg5[%c0_9, %c0_10] : memref<512x128xf32, #tpu.memory_space<vmem>>, vector<512x128xf32>
    %cst_11 = arith.constant dense<0.000000e+00> : vector<8x128xf32>
    %13 = tpu.matmul %10, %12, %cst_11 {dimension_numbers = #tpu.dot_dimension_numbers<[1], [0], [0], [1], [0, 0, 1, 1], [], []>} : vector<8x512xf32>, vector<512x128xf32>, vector<8x128xf32> -> vector<8x128xf32>
    %14 = arith.addf %11, %13 : vector<8x128xf32>
    %c0_12 = arith.constant 0 : index
    %c0_13 = arith.constant 0 : index
    %15 = vector.load %arg8[%c0_12, %c0_13] : memref<8x128xf32, #tpu.memory_space<vmem>>, vector<8x128xf32>
    tpu.vector_store %arg8[%c0_12, %c0_13], %14 {strides = array<i32>} : memref<8x128xf32, #tpu.memory_space<vmem>>, vector<8x128xf32>,
    %c0_i32_14 = arith.constant 0 : i32
    %16 = arith.cmpi eq, %arg1, %c0_i32_14 : i32
    %17 = arith.extui %16 : i1 to i32
    %c0_i32_15 = arith.constant 0 : i32
    %18 = arith.cmpi ne, %17, %c0_i32_15 : i32
    scf.if %18 {
      %c0_16 = arith.constant 0 : index
      %c0_17 = arith.constant 0 : index
      %19 = vector.load %arg8[%c0_16, %c0_17] : memref<8x128xf32, #tpu.memory_space<vmem>>, vector<8x128xf32>
      %c0_18 = arith.constant 0 : index
      %c0_19 = arith.constant 0 : index
      %20 = vector.load %arg6[%c0_18, %c0_19] : memref<1x128xf32, #tpu.memory_space<vmem>>, vector<1x128xf32>
      %21 = vector.broadcast %20 : vector<1x128xf32> to vector<8x128xf32>
      %22 = arith.addf %19, %21 : vector<8x128xf32>
      %c0_20 = arith.constant 0 : index
      %c0_21 = arith.constant 0 : index
      %23 = vector.load %arg7[%c0_20, %c0_21] : memref<8x128xf32, #tpu.memory_space<vmem>>, vector<8x128xf32>
      tpu.vector_store %arg7[%c0_20, %c0_21], %22 {strides = array<i32>} : memref<8x128xf32, #tpu.memory_space<vmem>>, vector<8x128xf32>,
    } else {
    }
    return
  }
  func.func @transform_0(%arg0: i32, %arg1: i32) -> (i32, i32) {
    %c0_i32 = arith.constant 0 : i32
    %c0_i32_0 = arith.constant 0 : i32
    return %arg0, %c0_i32 : i32, i32
  }
  func.func @transform_1(%arg0: i32, %arg1: i32) -> (i32, i32) {
    %c0_i32 = arith.constant 0 : i32
    %c0_i32_0 = arith.constant 0 : i32
    return %c0_i32, %arg1 : i32, i32
  }
  func.func @transform_2(%arg0: i32, %arg1: i32) -> (i32, i32) {
    %c0_i32 = arith.constant 0 : i32
    %c0_i32_0 = arith.constant 0 : i32
    return %c0_i32, %arg1 : i32, i32
  }
  func.func @transform_3(%arg0: i32, %arg1: i32) -> (i32, i32) {
    %c0_i32 = arith.constant 0 : i32
    %c0_i32_0 = arith.constant 0 : i32
    return %arg1, %c0_i32 : i32, i32
  }
  func.func @transform_4(%arg0: i32, %arg1: i32) -> (i32, i32) {
    %c0_i32 = arith.constant 0 : i32
    %c0_i32_0 = arith.constant 0 : i32
    %c0_i32_1 = arith.constant 0 : i32
    return %c0_i32, %c0_i32_0 : i32, i32
  }
  func.func @transform_5(%arg0: i32, %arg1: i32) -> (i32, i32) {
    %c0_i32 = arith.constant 0 : i32
    %c0_i32_0 = arith.constant 0 : i32
    return %arg0, %c0_i32 : i32, i32
  }
}

</mosaic_0001>

<llo_original>
// kernel: feed_forward.1
$region0: #{feed_forward.1}
  #allocation0 [shape = 'u32[]', space=smem, size = 0x4, offset = 0x4, fixed_abs, tag = 'smem constant byte address 0x4 - core index']
  #allocation1 [shape = 'u32[144,128]{1,0:T(1,128)}', space=vmem, size = 0x12000, scoped, tag = 'internal scratch']
  #allocation2 [shape = 'f32[8,128]{1,0:T(8,128)}', space=vmem, size = 0x1000, scoped, tag = 'scratch operand']
  %s0 = inlined_call_operand.hbm [shape: f32[16,128], index: 0, kind: input, shape index: {}]
  %s1 = inlined_call_operand.hbm [shape: f32[128,512], index: 1, kind: input, shape index: {}]
  %s2 = inlined_call_operand.vmem [shape: f32[1,512], index: 2, kind: input, shape index: {}]
  %s3 = inlined_call_operand.hbm [shape: f32[512,128], index: 3, kind: input, shape index: {}]
  %s4 = inlined_call_operand.vmem [shape: f32[1,128], index: 4, kind: input, shape index: {}]
  %s5 = inlined_call_operand.hbm [shape: f32[16,128], index: 5, kind: output, shape index: {}]
  %s6 = sld [smem:[#allocation0]]
  $region73: #{feed_forward.1} parent=0
    _
  %s8 = ssub.s32 1, %s6
  %s9 = scalar_select 0, %s8, %s6
  $region1: #{feed_forward.1} parent=0
    #allocation3 [shape = 'u8[8192]{0}', space=vmem, size = 0x2000, scoped, tag = 'input window, operand 0']
    #allocation4 [shape = 's32[2]{0}', space=sflag, size = 0x8, scoped, tag = 'scoped memory for feed_forward.1']
    #allocation5 [shape = 's32[2]{0}', space=sflag, size = 0x8, scoped, tag = 'scoped memory for feed_forward.1']
    #allocation6 [shape = 'u8[262144]{0}', space=vmem, size = 0x40000, scoped, tag = 'input window, operand 1, single buffered']
    #allocation7 [shape = 's32[1]{0}', space=sflag, size = 0x4, scoped, tag = 'scoped memory for feed_forward.1']
    #allocation8 [shape = 'u8[262144]{0}', space=vmem, size = 0x40000, scoped, tag = 'input window, operand 3, single buffered']
    #allocation9 [shape = 'u8[8192]{0}', space=vmem, size = 0x2000, scoped, tag = 'output window, operand 0']
    %10 = vsyncpa [#allocation4], 0
    %s11 = scalar_lea.sflag [#allocation4], 1
    %12 = vsyncpa %s11, 0
    %13 = vsyncpa [#allocation7], 0
    %14 = vsyncpa [#allocation5], 0
    %s15 = scalar_lea.sflag [#allocation5], 1
    %16 = vsyncpa %s15, 0
    loop: start=0, step=1, limit=4
    $region2: #{feed_forward.1} parent=1 // loop_pre_header
      _
    $region3: #{feed_forward.1} parent=1 // loop_header
      %s18 = sphi 0, %s22
      %p19 = scmp.ge.s32.totalorder %s18, 4
      %s25 = sphi 0, %s37
      %s26 = sphi 0, %s33
      %s27 = sphi 0, %s25
      %s28 = sphi 0, %s26
      %s29 = sphi 0, %s27
      %s30 = sphi 0, %s28
      %s40 = sphi 0, %s42
      %s43 = sphi 0, %s40
      %s44 = sphi 0, %s43
      %s60 = sphi 0, %s44
      %s66 = sphi 0, %s68
      %s69 = sphi 0, %s66
      %s70 = sphi 0, %s69
      %s86 = sphi 0, %s70
      %s92 = sphi 0, %s94
      %s95 = sphi 0, %s92
      %s96 = sphi 0, %s95
      %s112 = sphi 0, %s96
      %s118 = sphi 0, %s120
      %s121 = sphi 0, %s118
      %s122 = sphi 0, %s121
      %s138 = sphi 0, %s122
      %s142 = sphi 0, %s142
      %s144 = sphi 0, %s142
      %s145 = sphi 0, %s144
      %s159 = sphi 0, %s145
      %s165 = sphi 0, %s167
      %s168 = sphi 0, %s165
      %s169 = sphi 0, %s168
      %s185 = sphi 0, %s169
    $region4: #{feed_forward.1} parent=1 // loop_header_branch
      %21 = sbr.rel (%p19) target = $region8
    $region5: #{feed_forward.1} parent=1 // loop_body
      %s23 = ssub.s32 %s18, 1
      %s24 = ssub.s32 %s18, 2
      %s31 = sadd.s32 1, %s26
      %p32 = scmp.ge.s32.totalorder %s31, 1
      %s33 = scalar_select %p32, 0, %s31
      %s34 = sadd.s32 1, %s25
      %s35 = scalar_select %p32, %s34, %s25
      %p36 = scmp.ge.s32.totalorder %s35, 2
      %s37 = scalar_select %p36, 0, %s35
      %s38 = ssub.s32 %s25, %s37
      %p39 = scmp.eq.s32.totalorder %s38, 0
      %s41 = sadd.s32 %s40, 1
      %s42 = scalar_select %p39, %s40, %s41
      %p45 = pneg %p39
      %p46 = scmp.eq.s32.totalorder %s18, 1
      %p47 = por %p45, %p46
      %p48 = scmp.ne.s32.totalorder %s40, %s43
      %p49 = scmp.eq.s32.totalorder %s18, 0
      %p50 = por %p48, %p49
      %p51 = scmp.ne.s32.totalorder %s40, %s43
      %p52 = scmp.eq.s32.totalorder %s23, 1
      %p53 = por %p51, %p52
      %p54 = scmp.ne.s32.totalorder %s43, %s44
      %p55 = scmp.eq.s32.totalorder %s23, 0
      %p56 = por %p54, %p55
      %p57 = scmp.ne.s32.totalorder %s43, %s44
      %p58 = scmp.eq.s32.totalorder %s24, 1
      %p59 = por %p57, %p58
      %p61 = scmp.ne.s32.totalorder %s44, %s60
      %p62 = scmp.eq.s32.totalorder %s24, 0
      %p63 = por %p61, %p62
      %s64 = ssub.s32 %s26, %s33
      %p65 = scmp.eq.s32.totalorder %s64, 0
      %s67 = sadd.s32 %s66, 1
      %s68 = scalar_select %p65, %s66, %s67
      %p71 = pneg %p65
      %p72 = scmp.eq.s32.totalorder %s18, 1
      %p73 = por %p71, %p72
      %p74 = scmp.ne.s32.totalorder %s66, %s69
      %p75 = scmp.eq.s32.totalorder %s18, 0
      %p76 = por %p74, %p75
      %p77 = scmp.ne.s32.totalorder %s66, %s69
      %p78 = scmp.eq.s32.totalorder %s23, 1
      %p79 = por %p77, %p78
      %p80 = scmp.ne.s32.totalorder %s69, %s70
      %p81 = scmp.eq.s32.totalorder %s23, 0
      %p82 = por %p80, %p81
      %p83 = scmp.ne.s32.totalorder %s69, %s70
      %p84 = scmp.eq.s32.totalorder %s24, 1
      %p85 = por %p83, %p84
      %p87 = scmp.ne.s32.totalorder %s70, %s86
      %p88 = scmp.eq.s32.totalorder %s24, 0
      %p89 = por %p87, %p88
      %s90 = ssub.s32 %s26, %s33
      %p91 = scmp.eq.s32.totalorder %s90, 0
      %s93 = sadd.s32 %s92, 1
      %s94 = scalar_select %p91, %s92, %s93
      %p97 = pneg %p91
      %p98 = scmp.eq.s32.totalorder %s18, 1
      %p99 = por %p97, %p98
      %p100 = scmp.ne.s32.totalorder %s92, %s95
      %p101 = scmp.eq.s32.totalorder %s18, 0
      %p102 = por %p100, %p101
      %p103 = scmp.ne.s32.totalorder %s92, %s95
      %p104 = scmp.eq.s32.totalorder %s23, 1
      %p105 = por %p103, %p104
      %p106 = scmp.ne.s32.totalorder %s95, %s96
      %p107 = scmp.eq.s32.totalorder %s23, 0
      %p108 = por %p106, %p107
      %p109 = scmp.ne.s32.totalorder %s95, %s96
      %p110 = scmp.eq.s32.totalorder %s24, 1
      %p111 = por %p109, %p110
      %p113 = scmp.ne.s32.totalorder %s96, %s112
      %p114 = scmp.eq.s32.totalorder %s24, 0
      %p115 = por %p113, %p114
      %s116 = ssub.s32 %s26, %s33
      %p117 = scmp.eq.s32.totalorder %s116, 0
      %s119 = sadd.s32 %s118, 1
      %s120 = scalar_select %p117, %s118, %s119
      %p123 = pneg %p117
      %p124 = scmp.eq.s32.totalorder %s18, 1
      %p125 = por %p123, %p124
      %p126 = scmp.ne.s32.totalorder %s118, %s121
      %p127 = scmp.eq.s32.totalorder %s18, 0
      %p128 = por %p126, %p127
      %p129 = scmp.ne.s32.totalorder %s118, %s121
      %p130 = scmp.eq.s32.totalorder %s23, 1
      %p131 = por %p129, %p130
      %p132 = scmp.ne.s32.totalorder %s121, %s122
      %p133 = scmp.eq.s32.totalorder %s23, 0
      %p134 = por %p132, %p133
      %p135 = scmp.ne.s32.totalorder %s121, %s122
      %p136 = scmp.eq.s32.totalorder %s24, 1
      %p137 = por %p135, %p136
      %p139 = scmp.ne.s32.totalorder %s122, %s138
      %p140 = scmp.eq.s32.totalorder %s24, 0
      %p141 = por %p139, %p140
      %s143 = sadd.s32 %s142, 1
      %p146 = scmp.eq.s32.totalorder %s18, 1
      %p147 = scmp.ne.s32.totalorder %s142, %s144
      %p148 = scmp.eq.s32.totalorder %s18, 0
      %p149 = por %p147, %p148
      %p150 = scmp.ne.s32.totalorder %s142, %s144
      %p151 = scmp.eq.s32.totalorder %s23, 1
      %p152 = por %p150, %p151
      %p153 = scmp.ne.s32.totalorder %s144, %s145
      %p154 = scmp.eq.s32.totalorder %s23, 0
      %p155 = por %p153, %p154
      %p156 = scmp.ne.s32.totalorder %s144, %s145
      %p157 = scmp.eq.s32.totalorder %s24, 1
      %p158 = por %p156, %p157
      %p160 = scmp.ne.s32.totalorder %s145, %s159
      %p161 = scmp.eq.s32.totalorder %s24, 0
      %p162 = por %p160, %p161
      %s163 = ssub.s32 %s25, %s37
      %p164 = scmp.eq.s32.totalorder %s163, 0
      %s166 = sadd.s32 %s165, 1
      %s167 = scalar_select %p164, %s165, %s166
      %p170 = pneg %p164
      %p171 = scmp.eq.s32.totalorder %s18, 1
      %p172 = por %p170, %p171
      %p173 = scmp.ne.s32.totalorder %s165, %s168
      %p174 = scmp.eq.s32.totalorder %s18, 0
      %p175 = por %p173, %p174
      %p176 = scmp.ne.s32.totalorder %s165, %s168
      %p177 = scmp.eq.s32.totalorder %s23, 1
      %p178 = por %p176, %p177
      %p179 = scmp.ne.s32.totalorder %s168, %s169
      %p180 = scmp.eq.s32.totalorder %s23, 0
      %p181 = por %p179, %p180
      %p182 = scmp.ne.s32.totalorder %s168, %s169
      %p183 = scmp.eq.s32.totalorder %s24, 1
      %p184 = por %p182, %p183
      %p186 = scmp.ne.s32.totalorder %s169, %s185
      %p187 = scmp.eq.s32.totalorder %s24, 0
      %p188 = por %p186, %p187
      %p189 = scmp.le.s32.totalorder 1, %s18
      %p190 = scmp.lt.s32.totalorder %s18, 3
      %p191 = pnand %p189, %p190
      %p192 = pneg %p191
      // Predicated region
      $region9: #{feed_forward.1} parent=5 // pred_check
        _
      $region10: #{feed_forward.1} parent=5 // pred_check_branch
        %194 = sbr.rel (%p191) target = $region12
      $region11: #{feed_forward.1} parent=5 // pred_region
        %s195 = ssub.s32 %s18, 1
        // Predicated region
        $region13: #{feed_forward.1} parent=11 // pred_check
          %p196 = pneg %p82
        $region14: #{feed_forward.1} parent=11 // pred_check_branch
          %198 = sbr.rel (%p196) target = $region16
        $region15: #{feed_forward.1} parent=11 // pred_region
          %s199 = smul.u32 4, %s28
          %s201 = ssub.s32 8192, 8192
          %202 = vsyncadd [#allocation7], %s201
          %s203 = smul.addr %s199, 128
          %s204 = scalar_lea.hbm %s1, %s203
          %s205 = sshll.u32 [#allocation6], 4
          %s206 = int_to_ptr.vmem [resolvable:$true] %s205
          %211 = dma.hbm_to_vmem [thread:$0]  %s204, 8192, %s206, [#allocation7], 512, 512, 32
        $region16: #{feed_forward.1} parent=11 // pred_fallthru
          _
        // Predicated region
        $region17: #{feed_forward.1} parent=11 // pred_check
          %p212 = pneg %p108
        $region18: #{feed_forward.1} parent=11 // pred_check_branch
          %214 = sbr.rel (%p212) target = $region20
        $region19: #{feed_forward.1} parent=11 // pred_region
          %s215 = smul.u32 4, %s28
          %p216 = scmp.lt.s32.totalorder %s215, 3
          %s217 = scalar_select %p216, %s215, 3
          %s218 = scalar_lea.vmem %s2, %s217
          %s219 = smul.u32 4, %s28
        $region20: #{feed_forward.1} parent=11 // pred_fallthru
          _
        // Predicated region
        $region21: #{feed_forward.1} parent=11 // pred_check
          %p220 = pneg %p134
        $region22: #{feed_forward.1} parent=11 // pred_check_branch
          %222 = sbr.rel (%p220) target = $region24
        $region23: #{feed_forward.1} parent=11 // pred_region
          %s223 = smul.u32 64, %s28
          %s225 = ssub.s32 8192, 8192
          %226 = vsyncadd [#allocation7], %s225
          %s227 = smul.addr %s223, 128
          %s228 = scalar_lea.hbm %s3, %s227
          %s229 = sshll.u32 [#allocation8], 4
          %s230 = int_to_ptr.vmem [resolvable:$true] %s229
          %235 = dma.hbm_to_vmem [thread:$0]  %s228, 8192, %s230, [#allocation7], 128, 128, 8
        $region24: #{feed_forward.1} parent=11 // pred_fallthru
          _
        // Predicated region
        $region25: #{feed_forward.1} parent=11 // pred_check
          %p236 = pneg %p155
        $region26: #{feed_forward.1} parent=11 // pred_check_branch
          %238 = sbr.rel (%p236) target = $region28
        $region27: #{feed_forward.1} parent=11 // pred_region
          _
        $region28: #{feed_forward.1} parent=11 // pred_fallthru
          _
      $region12: #{feed_forward.1} parent=5 // pred_fallthru
        _
      %p239 = scmp.lt.s32.totalorder %s18, 2
      // Predicated region
      $region29: #{feed_forward.1} parent=5 // pred_check
        %p240 = pneg %p239
      $region30: #{feed_forward.1} parent=5 // pred_check_branch
        %242 = sbr.rel (%p240) target = $region32
      $region31: #{feed_forward.1} parent=5 // pred_region
        // Predicated region
        $region33: #{feed_forward.1} parent=31 // pred_check
          %p243 = pneg %p50
        $region34: #{feed_forward.1} parent=31 // pred_check_branch
          %245 = sbr.rel (%p243) target = $region36
        $region35: #{feed_forward.1} parent=31 // pred_region
          %s246 = sand.u32 %s40, 1
          %s247 = scalar_lea.sflag [#allocation4], %s246
          %s248 = sand.u32 %s40, 1
          %s249 = smul.addr %s248, 8
          %s250 = scalar_lea.vmem [#allocation3], %s249
          %s252 = ssub.s32 128, 128
          %253 = vsyncadd %s247, %s252
          %s254 = smul.addr %s25, 128
          %s255 = scalar_lea.hbm %s0, %s254
          %s257 = sshll.u32 %s250, 4
          %s258 = int_to_ptr.vmem [resolvable:$true] %s257
          %260 = dma.hbm_to_vmem [thread:$0]  %s255, 128, %s258, %s247
        $region36: #{feed_forward.1} parent=31 // pred_fallthru
          _
      $region32: #{feed_forward.1} parent=5 // pred_fallthru
        _
      %p261 = scmp.le.s32.totalorder 1, %s18
      %p262 = scmp.lt.s32.totalorder %s18, 3
      %p263 = pnand %p261, %p262
      %p264 = pneg %p263
      // Predicated region
      $region37: #{feed_forward.1} parent=5 // pred_check
        _
      $region38: #{feed_forward.1} parent=5 // pred_check_branch
        %266 = sbr.rel (%p263) target = $region40
      $region39: #{feed_forward.1} parent=5 // pred_region
        %s267 = ssub.s32 %s18, 1
        %s268 = sand.u32 %s43, 1
        %s269 = scalar_lea.sflag [#allocation4], %s268
        %s270 = sand.u32 %s43, 1
        %s271 = smul.addr %s270, 8
        %s272 = scalar_lea.vmem [#allocation3], %s271
        // Predicated region
        $region41: #{feed_forward.1} parent=39 // pred_check
          %p273 = pneg %p56
        $region42: #{feed_forward.1} parent=39 // pred_check_branch
          %275 = sbr.rel (%p273) target = $region44
        $region43: #{feed_forward.1} parent=39 // pred_region
          %276 = dma.done %s269, 128
        $region44: #{feed_forward.1} parent=39 // pred_fallthru
          _
        // Predicated region
        $region45: #{feed_forward.1} parent=39 // pred_check
          %p277 = pneg %p82
        $region46: #{feed_forward.1} parent=39 // pred_check_branch
          %279 = sbr.rel (%p277) target = $region48
        $region47: #{feed_forward.1} parent=39 // pred_region
          %280 = dma.done [#allocation7], 8192
        $region48: #{feed_forward.1} parent=39 // pred_fallthru
          _
        // Predicated region
        $region49: #{feed_forward.1} parent=39 // pred_check
          %p281 = pneg %p134
        $region50: #{feed_forward.1} parent=39 // pred_check_branch
          %283 = sbr.rel (%p281) target = $region52
        $region51: #{feed_forward.1} parent=39 // pred_region
          %284 = dma.done [#allocation7], 8192
        $region52: #{feed_forward.1} parent=39 // pred_fallthru
          _
        %s285 = sand.u32 %s43, 1
        %s286 = scalar_lea.sflag [#allocation4], %s285
        %s287 = sand.u32 %s43, 1
        %s288 = smul.addr %s287, 8
        %s289 = scalar_lea.vmem [#allocation3], %s288
        %p290 = pneg %p56
        %p291 = pneg %p53
        %p292 = pneg %p82
        %p293 = pneg %p79
        %s294 = smul.u32 4, %s28
        %p295 = scmp.lt.s32.totalorder %s294, 3
        %s296 = scalar_select %p295, %s294, 3
        %s297 = scalar_lea.vmem %s2, %s296
        %p298 = pneg %p108
        %p299 = pneg %p105
        %p300 = pneg %p134
        %p301 = pneg %p131
        %p302 = pneg %p155
        %p303 = pneg %p152
        %p304 = pneg %p181
        %p305 = pneg %p178
        %s306 = sand.u32 %s168, 1
        %s307 = scalar_lea.sflag [#allocation5], %s306
        %s308 = sand.u32 %s168, 1
        %s309 = smul.addr %s308, 8
        %s310 = scalar_lea.vmem [#allocation9], %s309
        %s311 = smul.u32 4, %s28
        %s312 = smul.u32 4, %s28
        %p313 = scmp.lt.s32.totalorder %s312, 3
        %s314 = scalar_select %p313, %s312, 3
        %s315 = scalar_lea.vmem %s2, %s314
        %s316 = smul.u32 4, %s28
        %s317 = smul.u32 64, %s28
        %p318 = scmp.eq.s32.totalorder %s28, 0
        // Predicated region
        $region53: #{feed_forward.1} parent=39 // pred_check
          %p319 = pneg %p318
        $region54: #{feed_forward.1} parent=39 // pred_check_branch
          %321 = sbr.rel (%p319) target = $region56
        $region55: #{feed_forward.1} parent=39 // pred_region
          %322 = vst [vmem:[#allocation2] sm:$0xff] 0.0
        $region56: #{feed_forward.1} parent=39 // pred_fallthru
          _
        %v323 = vld [vmem:[%s272] sm:$0xff]
        %v324 = vld [vmem:[#allocation6] sm:$0xff]
        %v325 = vld [vmem:[#allocation6 + $0x8] sm:$0xff]
        %v326 = vld [vmem:[#allocation6 + $0x10] sm:$0xff]
        %v327 = vld [vmem:[#allocation6 + $0x18] sm:$0xff]
        %v328 = vld [vmem:[#allocation6 + $0x20] sm:$0xff]
        %v329 = vld [vmem:[#allocation6 + $0x28] sm:$0xff]
        %v330 = vld [vmem:[#allocation6 + $0x30] sm:$0xff]
        %v331 = vld [vmem:[#allocation6 + $0x38] sm:$0xff]
        %v332 = vld [vmem:[#allocation6 + $0x40] sm:$0xff]
        %v333 = vld [vmem:[#allocation6 + $0x48] sm:$0xff]
        %v334 = vld [vmem:[#allocation6 + $0x50] sm:$0xff]
        %v335 = vld [vmem:[#allocation6 + $0x58] sm:$0xff]
        %v336 = vld [vmem:[#allocation6 + $0x60] sm:$0xff]
        %v337 = vld [vmem:[#allocation6 + $0x68] sm:$0xff]
        %v338 = vld [vmem:[#allocation6 + $0x70] sm:$0xff]
        %v339 = vld [vmem:[#allocation6 + $0x78] sm:$0xff]
        %v340 = vld [vmem:[#allocation6 + $0x80] sm:$0xff]
        %v341 = vld [vmem:[#allocation6 + $0x88] sm:$0xff]
        %v342 = vld [vmem:[#allocation6 + $0x90] sm:$0xff]
        %v343 = vld [vmem:[#allocation6 + $0x98] sm:$0xff]
        %v344 = vld [vmem:[#allocation6 + $0xa0] sm:$0xff]
        %v345 = vld [vmem:[#allocation6 + $0xa8] sm:$0xff]
        %v346 = vld [vmem:[#allocation6 + $0xb0] sm:$0xff]
        %v347 = vld [vmem:[#allocation6 + $0xb8] sm:$0xff]
        %v348 = vld [vmem:[#allocation6 + $0xc0] sm:$0xff]
        %v349 = vld [vmem:[#allocation6 + $0xc8] sm:$0xff]
        %v350 = vld [vmem:[#allocation6 + $0xd0] sm:$0xff]
        %v351 = vld [vmem:[#allocation6 + $0xd8] sm:$0xff]
        %v352 = vld [vmem:[#allocation6 + $0xe0] sm:$0xff]
        %v353 = vld [vmem:[#allocation6 + $0xe8] sm:$0xff]
        %v354 = vld [vmem:[#allocation6 + $0xf0] sm:$0xff]
        %v355 = vld [vmem:[#allocation6 + $0xf8] sm:$0xff]
        %v356 = vld [vmem:[#allocation6 + $0x100] sm:$0xff]
        %v357 = vld [vmem:[#allocation6 + $0x108] sm:$0xff]
        %v358 = vld [vmem:[#allocation6 + $0x110] sm:$0xff]
        %v359 = vld [vmem:[#allocation6 + $0x118] sm:$0xff]
        %v360 = vld [vmem:[#allocation6 + $0x120] sm:$0xff]
        %v361 = vld [vmem:[#allocation6 + $0x128] sm:$0xff]
        %v362 = vld [vmem:[#allocation6 + $0x130] sm:$0xff]
        %v363 = vld [vmem:[#allocation6 + $0x138] sm:$0xff]
        %v364 = vld [vmem:[#allocation6 + $0x140] sm:$0xff]
        %v365 = vld [vmem:[#allocation6 + $0x148] sm:$0xff]
        %v366 = vld [vmem:[#allocation6 + $0x150] sm:$0xff]
        %v367 = vld [vmem:[#allocation6 + $0x158] sm:$0xff]
        %v368 = vld [vmem:[#allocation6 + $0x160] sm:$0xff]
        %v369 = vld [vmem:[#allocation6 + $0x168] sm:$0xff]
        %v370 = vld [vmem:[#allocation6 + $0x170] sm:$0xff]
        %v371 = vld [vmem:[#allocation6 + $0x178] sm:$0xff]
        %v372 = vld [vmem:[#allocation6 + $0x180] sm:$0xff]
        %v373 = vld [vmem:[#allocation6 + $0x188] sm:$0xff]
        %v374 = vld [vmem:[#allocation6 + $0x190] sm:$0xff]
        %v375 = vld [vmem:[#allocation6 + $0x198] sm:$0xff]
        %v376 = vld [vmem:[#allocation6 + $0x1a0] sm:$0xff]
        %v377 = vld [vmem:[#allocation6 + $0x1a8] sm:$0xff]
        %v378 = vld [vmem:[#allocation6 + $0x1b0] sm:$0xff]
        %v379 = vld [vmem:[#allocation6 + $0x1b8] sm:$0xff]
        %v380 = vld [vmem:[#allocation6 + $0x1c0] sm:$0xff]
        %v381 = vld [vmem:[#allocation6 + $0x1c8] sm:$0xff]
        %v382 = vld [vmem:[#allocation6 + $0x1d0] sm:$0xff]
        %v383 = vld [vmem:[#allocation6 + $0x1d8] sm:$0xff]
        %v384 = vld [vmem:[#allocation6 + $0x1e0] sm:$0xff]
        %v385 = vld [vmem:[#allocation6 + $0x1e8] sm:$0xff]
        %v386 = vld [vmem:[#allocation6 + $0x1f0] sm:$0xff]
        %v387 = vld [vmem:[#allocation6 + $0x1f8] sm:$0xff]
        %v388 = vld [vmem:[%s315] sm:$0xf]
        %v390 = vlaneseq
        %v391 = vshrl.u32 %v390, 7
        %v392 = vsub.s32 0, %v391
        %v393 = vrot.slane %v388, %v392
        %v394 = vlaneseq
        %v395 = vshrl.u32 %v394, 7
        %v396 = vsub.s32 1, %v395
        %v397 = vrot.slane %v388, %v396
        %v398 = vlaneseq
        %v399 = vshrl.u32 %v398, 7
        %v400 = vsub.s32 2, %v399
        %v401 = vrot.slane %v388, %v400
        %v402 = vlaneseq
        %v403 = vshrl.u32 %v402, 7
        %v404 = vsub.s32 3, %v403
        %v405 = vrot.slane %v388, %v404
        %410 = vmatprep.subr.mxu0 %v385
        %411 = vmatpush1.msra.mxu0 %v384
        %412 = vmatprep.subr.mxu0 %v381
        %413 = vmatpush1.msra.mxu0 %v380
        %414 = vmatprep.subr.mxu0 %v377
        %415 = vmatpush1.msra.mxu0 %v376
        %416 = vmatprep.subr.mxu0 %v373
        %417 = vmatpush1.msra.mxu0 %v372
        %418 = vmatprep.subr.mxu0 %v369
        %419 = vmatpush1.msra.mxu0 %v368
        %420 = vmatprep.subr.mxu0 %v365
        %421 = vmatpush1.msra.mxu0 %v364
        %422 = vmatprep.subr.mxu0 %v361
        %423 = vmatpush1.msra.mxu0 %v360
        %424 = vmatprep.subr.mxu0 %v357
        %425 = vmatpush1.msra.mxu0 %v356
        %426 = vmatprep.subr.mxu0 %v353
        %427 = vmatpush1.msra.mxu0 %v352
        %428 = vmatprep.subr.mxu0 %v349
        %429 = vmatpush1.msra.mxu0 %v348
        %430 = vmatprep.subr.mxu0 %v345
        %431 = vmatpush1.msra.mxu0 %v344
        %432 = vmatprep.subr.mxu0 %v341
        %433 = vmatpush1.msra.mxu0 %v340
        %434 = vmatprep.subr.mxu0 %v337
        %435 = vmatpush1.msra.mxu0 %v336
        %436 = vmatprep.subr.mxu0 %v333
        %437 = vmatpush1.msra.mxu0 %v332
        %438 = vmatprep.subr.mxu0 %v329
        %439 = vmatpush1.msra.mxu0 %v328
        %440 = vmatprep.subr.mxu0 %v325
        %441 = vmatpush1.msra.mxu0 %v324
        %442 = vmatprep.subr.mxu0 0.0
        %443 = vmatpush2.msra.mxu0 0.0
        %444 = vmatprep.subr.mxu0 0.0
        %445 = vmatpush2.msra.mxu0 0.0
        %446 = vmatprep.subr.mxu0 0.0
        %447 = vmatpush2.msra.mxu0 0.0
        %448 = vmatprep.subr.mxu0 0.0
        %449 = vmatpush2.msra.mxu0 0.0
        %450 = vmatprep.subr.mxu0 0.0
        %451 = vmatpush2.msra.mxu0 0.0
        %452 = vmatprep.subr.mxu0 0.0
        %453 = vmatpush2.msra.mxu0 0.0
        %454 = vmatprep.subr.mxu0 0.0
        %455 = vmatpush2.msra.mxu0 0.0
        %456 = vmatprep.subr.mxu0 0.0
        %457 = vmatpush2.msra.mxu0 0.0
        %458 = vmatprep.subr.mxu0 0.0
        %459 = vmatpush2.msra.mxu0 0.0
        %460 = vmatprep.subr.mxu0 0.0
        %461 = vmatpush2.msra.mxu0 0.0
        %462 = vmatprep.subr.mxu0 0.0
        %463 = vmatpush2.msra.mxu0 0.0
        %464 = vmatprep.subr.mxu0 0.0
        %465 = vmatpush2.msra.mxu0 0.0
        %466 = vmatprep.subr.mxu0 0.0
        %467 = vmatpush2.msra.mxu0 0.0
        %468 = vmatprep.subr.mxu0 0.0
        %469 = vmatpush2.msra.mxu0 0.0
        %470 = vmatprep.subr.mxu0 0.0
        %471 = vmatpush2.msra.mxu0 0.0
        %472 = vmatprep.subr.mxu0 0.0
        %473 = vmatpush2.msra.mxu0 0.0
        %474 = vmatprep.mubr.f32.mxu0 0.0
        %475 = vmatmul.mubr.f32.gmra.mxu0 %v323
        %v476 = vpop.f32.mrf.mxu0
        %v477 = vadd.f32 %v393, %v476
        %v478 = vpop.f32.mrf.mxu0
        %v479 = vadd.f32 %v397, %v478
        %480 = vdwg.mxu0
        %481 = vmatprep.subr.mxu0 %v387
        %482 = vmatpush1.msra.mxu0 %v386
        %483 = vmatprep.subr.mxu0 %v383
        %484 = vmatpush1.msra.mxu0 %v382
        %485 = vmatprep.subr.mxu0 %v379
        %486 = vmatpush1.msra.mxu0 %v378
        %487 = vmatprep.subr.mxu0 %v375
        %488 = vmatpush1.msra.mxu0 %v374
        %489 = vmatprep.subr.mxu0 %v371
        %490 = vmatpush1.msra.mxu0 %v370
        %491 = vmatprep.subr.mxu0 %v367
        %492 = vmatpush1.msra.mxu0 %v366
        %493 = vmatprep.subr.mxu0 %v363
        %494 = vmatpush1.msra.mxu0 %v362
        %495 = vmatprep.subr.mxu0 %v359
        %496 = vmatpush1.msra.mxu0 %v358
        %497 = vmatprep.subr.mxu0 %v355
        %498 = vmatpush1.msra.mxu0 %v354
        %499 = vmatprep.subr.mxu0 %v351
        %500 = vmatpush1.msra.mxu0 %v350
        %501 = vmatprep.subr.mxu0 %v347
        %502 = vmatpush1.msra.mxu0 %v346
        %503 = vmatprep.subr.mxu0 %v343
        %504 = vmatpush1.msra.mxu0 %v342
        %505 = vmatprep.subr.mxu0 %v339
        %506 = vmatpush1.msra.mxu0 %v338
        %507 = vmatprep.subr.mxu0 %v335
        %508 = vmatpush1.msra.mxu0 %v334
        %509 = vmatprep.subr.mxu0 %v331
        %510 = vmatpush1.msra.mxu0 %v330
        %511 = vmatprep.subr.mxu0 %v327
        %512 = vmatpush1.msra.mxu0 %v326
        %513 = vmatprep.subr.mxu0 0.0
        %514 = vmatpush2.msra.mxu0 0.0
        %515 = vmatprep.subr.mxu0 0.0
        %516 = vmatpush2.msra.mxu0 0.0
        %517 = vmatprep.subr.mxu0 0.0
        %518 = vmatpush2.msra.mxu0 0.0
        %519 = vmatprep.subr.mxu0 0.0
        %520 = vmatpush2.msra.mxu0 0.0
        %521 = vmatprep.subr.mxu0 0.0
        %522 = vmatpush2.msra.mxu0 0.0
        %523 = vmatprep.subr.mxu0 0.0
        %524 = vmatpush2.msra.mxu0 0.0
        %525 = vmatprep.subr.mxu0 0.0
        %526 = vmatpush2.msra.mxu0 0.0
        %527 = vmatprep.subr.mxu0 0.0
        %528 = vmatpush2.msra.mxu0 0.0
        %529 = vmatprep.subr.mxu0 0.0
        %530 = vmatpush2.msra.mxu0 0.0
        %531 = vmatprep.subr.mxu0 0.0
        %532 = vmatpush2.msra.mxu0 0.0
        %533 = vmatprep.subr.mxu0 0.0
        %534 = vmatpush2.msra.mxu0 0.0
        %535 = vmatprep.subr.mxu0 0.0
        %536 = vmatpush2.msra.mxu0 0.0
        %537 = vmatprep.subr.mxu0 0.0
        %538 = vmatpush2.msra.mxu0 0.0
        %539 = vmatprep.subr.mxu0 0.0
        %540 = vmatpush2.msra.mxu0 0.0
        %541 = vmatprep.subr.mxu0 0.0
        %542 = vmatpush2.msra.mxu0 0.0
        %543 = vmatprep.subr.mxu0 0.0
        %544 = vmatpush2.msra.mxu0 0.0
        %545 = vmatprep.mubr.f32.mxu0 0.0
        %546 = vmatmul.mubr.f32.gmra.mxu0 %v323
        %v547 = vpop.f32.mrf.mxu0
        %v548 = vadd.f32 %v401, %v547
        %v549 = vpop.f32.mrf.mxu0
        %v550 = vadd.f32 %v405, %v549
        %551 = vdwg.mxu0
        %v552 = vmax.f32 %v477, 0.0
        %v553 = vmax.f32 %v479, 0.0
        %v554 = vmax.f32 %v548, 0.0
        %v555 = vmax.f32 %v550, 0.0
        %v556 = vld [vmem:[#allocation2] sm:$0xff]
        %v557 = vld [vmem:[#allocation8] sm:$0xff]
        %v558 = vld [vmem:[#allocation8 + $0x8] sm:$0xff]
        %v559 = vld [vmem:[#allocation8 + $0x10] sm:$0xff]
        %v560 = vld [vmem:[#allocation8 + $0x18] sm:$0xff]
        %v561 = vld [vmem:[#allocation8 + $0x20] sm:$0xff]
        %v562 = vld [vmem:[#allocation8 + $0x28] sm:$0xff]
        %v563 = vld [vmem:[#allocation8 + $0x30] sm:$0xff]
        %v564 = vld [vmem:[#allocation8 + $0x38] sm:$0xff]
        %v565 = vld [vmem:[#allocation8 + $0x40] sm:$0xff]
        %v566 = vld [vmem:[#allocation8 + $0x48] sm:$0xff]
        %v567 = vld [vmem:[#allocation8 + $0x50] sm:$0xff]
        %v568 = vld [vmem:[#allocation8 + $0x58] sm:$0xff]
        %v569 = vld [vmem:[#allocation8 + $0x60] sm:$0xff]
        %v570 = vld [vmem:[#allocation8 + $0x68] sm:$0xff]
        %v571 = vld [vmem:[#allocation8 + $0x70] sm:$0xff]
        %v572 = vld [vmem:[#allocation8 + $0x78] sm:$0xff]
        %v573 = vld [vmem:[#allocation8 + $0x80] sm:$0xff]
        %v574 = vld [vmem:[#allocation8 + $0x88] sm:$0xff]
        %v575 = vld [vmem:[#allocation8 + $0x90] sm:$0xff]
        %v576 = vld [vmem:[#allocation8 + $0x98] sm:$0xff]
        %v577 = vld [vmem:[#allocation8 + $0xa0] sm:$0xff]
        %v578 = vld [vmem:[#allocation8 + $0xa8] sm:$0xff]
        %v579 = vld [vmem:[#allocation8 + $0xb0] sm:$0xff]
        %v580 = vld [vmem:[#allocation8 + $0xb8] sm:$0xff]
        %v581 = vld [vmem:[#allocation8 + $0xc0] sm:$0xff]
        %v582 = vld [vmem:[#allocation8 + $0xc8] sm:$0xff]
        %v583 = vld [vmem:[#allocation8 + $0xd0] sm:$0xff]
        %v584 = vld [vmem:[#allocation8 + $0xd8] sm:$0xff]
        %v585 = vld [vmem:[#allocation8 + $0xe0] sm:$0xff]
        %v586 = vld [vmem:[#allocation8 + $0xe8] sm:$0xff]
        %v587 = vld [vmem:[#allocation8 + $0xf0] sm:$0xff]
        %v588 = vld [vmem:[#allocation8 + $0xf8] sm:$0xff]
        %v589 = vld [vmem:[#allocation8 + $0x100] sm:$0xff]
        %v590 = vld [vmem:[#allocation8 + $0x108] sm:$0xff]
        %v591 = vld [vmem:[#allocation8 + $0x110] sm:$0xff]
        %v592 = vld [vmem:[#allocation8 + $0x118] sm:$0xff]
        %v593 = vld [vmem:[#allocation8 + $0x120] sm:$0xff]
        %v594 = vld [vmem:[#allocation8 + $0x128] sm:$0xff]
        %v595 = vld [vmem:[#allocation8 + $0x130] sm:$0xff]
        %v596 = vld [vmem:[#allocation8 + $0x138] sm:$0xff]
        %v597 = vld [vmem:[#allocation8 + $0x140] sm:$0xff]
        %v598 = vld [vmem:[#allocation8 + $0x148] sm:$0xff]
        %v599 = vld [vmem:[#allocation8 + $0x150] sm:$0xff]
        %v600 = vld [vmem:[#allocation8 + $0x158] sm:$0xff]
        %v601 = vld [vmem:[#allocation8 + $0x160] sm:$0xff]
        %v602 = vld [vmem:[#allocation8 + $0x168] sm:$0xff]
        %v603 = vld [vmem:[#allocation8 + $0x170] sm:$0xff]
        %v604 = vld [vmem:[#allocation8 + $0x178] sm:$0xff]
        %v605 = vld [vmem:[#allocation8 + $0x180] sm:$0xff]
        %v606 = vld [vmem:[#allocation8 + $0x188] sm:$0xff]
        %v607 = vld [vmem:[#allocation8 + $0x190] sm:$0xff]
        %v608 = vld [vmem:[#allocation8 + $0x198] sm:$0xff]
        %v609 = vld [vmem:[#allocation8 + $0x1a0] sm:$0xff]
        %v610 = vld [vmem:[#allocation8 + $0x1a8] sm:$0xff]
        %v611 = vld [vmem:[#allocation8 + $0x1b0] sm:$0xff]
        %v612 = vld [vmem:[#allocation8 + $0x1b8] sm:$0xff]
        %v613 = vld [vmem:[#allocation8 + $0x1c0] sm:$0xff]
        %v614 = vld [vmem:[#allocation8 + $0x1c8] sm:$0xff]
        %v615 = vld [vmem:[#allocation8 + $0x1d0] sm:$0xff]
        %v616 = vld [vmem:[#allocation8 + $0x1d8] sm:$0xff]
        %v617 = vld [vmem:[#allocation8 + $0x1e0] sm:$0xff]
        %v618 = vld [vmem:[#allocation8 + $0x1e8] sm:$0xff]
        %v619 = vld [vmem:[#allocation8 + $0x1f0] sm:$0xff]
        %v620 = vld [vmem:[#allocation8 + $0x1f8] sm:$0xff]
        %621 = vmatprep.subr.mxu0 0.0
        %622 = vmatpush1.msra.mxu0 %v572
        %623 = vmatprep.subr.mxu0 0.0
        %624 = vmatpush1.msra.mxu0 %v571
        %625 = vmatprep.subr.mxu0 0.0
        %626 = vmatpush1.msra.mxu0 %v570
        %627 = vmatprep.subr.mxu0 0.0
        %628 = vmatpush1.msra.mxu0 %v569
        %629 = vmatprep.subr.mxu0 0.0
        %630 = vmatpush1.msra.mxu0 %v568
        %631 = vmatprep.subr.mxu0 0.0
        %632 = vmatpush1.msra.mxu0 %v567
        %633 = vmatprep.subr.mxu0 0.0
        %634 = vmatpush1.msra.mxu0 %v566
        %635 = vmatprep.subr.mxu0 0.0
        %636 = vmatpush1.msra.mxu0 %v565
        %637 = vmatprep.subr.mxu0 0.0
        %638 = vmatpush1.msra.mxu0 %v564
        %639 = vmatprep.subr.mxu0 0.0
        %640 = vmatpush1.msra.mxu0 %v563
        %641 = vmatprep.subr.mxu0 0.0
        %642 = vmatpush1.msra.mxu0 %v562
        %643 = vmatprep.subr.mxu0 0.0
        %644 = vmatpush1.msra.mxu0 %v561
        %645 = vmatprep.subr.mxu0 0.0
        %646 = vmatpush1.msra.mxu0 %v560
        %647 = vmatprep.subr.mxu0 0.0
        %648 = vmatpush1.msra.mxu0 %v559
        %649 = vmatprep.subr.mxu0 0.0
        %650 = vmatpush1.msra.mxu0 %v558
        %651 = vmatprep.subr.mxu0 0.0
        %652 = vmatpush1.msra.mxu0 %v557
        %653 = vmatprep.subr.mxu0 0.0
        %654 = vmatpush2.msra.mxu0 %v588
        %655 = vmatprep.subr.mxu0 0.0
        %656 = vmatpush2.msra.mxu0 %v587
        %657 = vmatprep.subr.mxu0 0.0
        %658 = vmatpush2.msra.mxu0 %v586
        %659 = vmatprep.subr.mxu0 0.0
        %660 = vmatpush2.msra.mxu0 %v585
        %661 = vmatprep.subr.mxu0 0.0
        %662 = vmatpush2.msra.mxu0 %v584
        %663 = vmatprep.subr.mxu0 0.0
        %664 = vmatpush2.msra.mxu0 %v583
        %665 = vmatprep.subr.mxu0 0.0
        %666 = vmatpush2.msra.mxu0 %v582
        %667 = vmatprep.subr.mxu0 0.0
        %668 = vmatpush2.msra.mxu0 %v581
        %669 = vmatprep.subr.mxu0 0.0
        %670 = vmatpush2.msra.mxu0 %v580
        %671 = vmatprep.subr.mxu0 0.0
        %672 = vmatpush2.msra.mxu0 %v579
        %673 = vmatprep.subr.mxu0 0.0
        %674 = vmatpush2.msra.mxu0 %v578
        %675 = vmatprep.subr.mxu0 0.0
        %676 = vmatpush2.msra.mxu0 %v577
        %677 = vmatprep.subr.mxu0 0.0
        %678 = vmatpush2.msra.mxu0 %v576
        %679 = vmatprep.subr.mxu0 0.0
        %680 = vmatpush2.msra.mxu0 %v575
        %681 = vmatprep.subr.mxu0 0.0
        %682 = vmatpush2.msra.mxu0 %v574
        %683 = vmatprep.subr.mxu0 0.0
        %684 = vmatpush2.msra.mxu0 %v573
        %685 = vmatprep.mubr.f32.mxu0 %v553
        %686 = vmatmul.mubr.f32.gmra.mxu0 %v552
        %v687 = vpop.f32.mrf.mxu0
        %v688 = vadd.f32 0.0, %v687
        %v689 = vpop.f32.mrf.mxu0
        %690 = vdwg.mxu0
        %691 = vmatprep.subr.mxu0 0.0
        %692 = vmatpush1.msra.mxu0 %v604
        %693 = vmatprep.subr.mxu0 0.0
        %694 = vmatpush1.msra.mxu0 %v603
        %695 = vmatprep.subr.mxu0 0.0
        %696 = vmatpush1.msra.mxu0 %v602
        %697 = vmatprep.subr.mxu0 0.0
        %698 = vmatpush1.msra.mxu0 %v601
        %699 = vmatprep.subr.mxu0 0.0
        %700 = vmatpush1.msra.mxu0 %v600
        %701 = vmatprep.subr.mxu0 0.0
        %702 = vmatpush1.msra.mxu0 %v599
        %703 = vmatprep.subr.mxu0 0.0
        %704 = vmatpush1.msra.mxu0 %v598
        %705 = vmatprep.subr.mxu0 0.0
        %706 = vmatpush1.msra.mxu0 %v597
        %707 = vmatprep.subr.mxu0 0.0
        %708 = vmatpush1.msra.mxu0 %v596
        %709 = vmatprep.subr.mxu0 0.0
        %710 = vmatpush1.msra.mxu0 %v595
        %711 = vmatprep.subr.mxu0 0.0
        %712 = vmatpush1.msra.mxu0 %v594
        %713 = vmatprep.subr.mxu0 0.0
        %714 = vmatpush1.msra.mxu0 %v593
        %715 = vmatprep.subr.mxu0 0.0
        %716 = vmatpush1.msra.mxu0 %v592
        %717 = vmatprep.subr.mxu0 0.0
        %718 = vmatpush1.msra.mxu0 %v591
        %719 = vmatprep.subr.mxu0 0.0
        %720 = vmatpush1.msra.mxu0 %v590
        %721 = vmatprep.subr.mxu0 0.0
        %722 = vmatpush1.msra.mxu0 %v589
        %723 = vmatprep.subr.mxu0 0.0
        %724 = vmatpush2.msra.mxu0 %v620
        %725 = vmatprep.subr.mxu0 0.0
        %726 = vmatpush2.msra.mxu0 %v619
        %727 = vmatprep.subr.mxu0 0.0
        %728 = vmatpush2.msra.mxu0 %v618
        %729 = vmatprep.subr.mxu0 0.0
        %730 = vmatpush2.msra.mxu0 %v617
        %731 = vmatprep.subr.mxu0 0.0
        %732 = vmatpush2.msra.mxu0 %v616
        %733 = vmatprep.subr.mxu0 0.0
        %734 = vmatpush2.msra.mxu0 %v615
        %735 = vmatprep.subr.mxu0 0.0
        %736 = vmatpush2.msra.mxu0 %v614
        %737 = vmatprep.subr.mxu0 0.0
        %738 = vmatpush2.msra.mxu0 %v613
        %739 = vmatprep.subr.mxu0 0.0
        %740 = vmatpush2.msra.mxu0 %v612
        %741 = vmatprep.subr.mxu0 0.0
        %742 = vmatpush2.msra.mxu0 %v611
        %743 = vmatprep.subr.mxu0 0.0
        %744 = vmatpush2.msra.mxu0 %v610
        %745 = vmatprep.subr.mxu0 0.0
        %746 = vmatpush2.msra.mxu0 %v609
        %747 = vmatprep.subr.mxu0 0.0
        %748 = vmatpush2.msra.mxu0 %v608
        %749 = vmatprep.subr.mxu0 0.0
        %750 = vmatpush2.msra.mxu0 %v607
        %751 = vmatprep.subr.mxu0 0.0
        %752 = vmatpush2.msra.mxu0 %v606
        %753 = vmatprep.subr.mxu0 0.0
        %754 = vmatpush2.msra.mxu0 %v605
        %755 = vmatprep.mubr.f32.mxu0 %v555
        %756 = vmatmul.mubr.f32.gmra.mxu0 %v554
        %v757 = vpop.f32.mrf.mxu0
        %v758 = vadd.f32 %v688, %v757
        %v759 = vpop.f32.mrf.mxu0
        %760 = vdwg.mxu0
        %v761 = vadd.f32 %v556, %v758
        %762 = vst [vmem:[#allocation2] sm:$0xff] %v761
        // Predicated region
        $region57: #{feed_forward.1} parent=39 // pred_check
          %p763 = pneg %p318
        $region58: #{feed_forward.1} parent=39 // pred_check_branch
          %765 = sbr.rel (%p763) target = $region60
        $region59: #{feed_forward.1} parent=39 // pred_region
          %v766 = vld [vmem:[#allocation2] sm:$0xff]
          %v767 = vld [vmem:[%s4] sm:$0x1]
          %v769 = vlaneseq
          %v770 = vshrl.u32 %v769, 7
          %v771 = vsub.s32 0, %v770
          %v772 = vrot.slane %v767, %v771
          %v774 = vadd.f32 %v766, %v772
          %775 = vst [vmem:[%s310] sm:$0xff] %v774
        $region60: #{feed_forward.1} parent=39 // pred_fallthru
          _
        %s776 = sand.u32 %s168, 1
        %s777 = scalar_lea.sflag [#allocation5], %s776
        %s778 = sand.u32 %s168, 1
        %s779 = smul.addr %s778, 8
        %s780 = scalar_lea.vmem [#allocation9], %s779
        // Predicated region
        $region61: #{feed_forward.1} parent=39 // pred_check
          %p781 = pneg %p178
        $region62: #{feed_forward.1} parent=39 // pred_check_branch
          %783 = sbr.rel (%p781) target = $region64
        $region63: #{feed_forward.1} parent=39 // pred_region
          %s785 = ssub.s32 128, 128
          %786 = vsyncadd %s777, %s785
          %s787 = smul.addr %s27, 128
          %s788 = scalar_lea.hbm %s5, %s787
          %s790 = sshll.u32 %s780, 4
          %s791 = int_to_ptr.vmem [resolvable:$true] %s790
          %793 = dma.vmem_to_hbm [thread:$0]  %s791, 128, %s788, %s777
        $region64: #{feed_forward.1} parent=39 // pred_fallthru
          _
      $region40: #{feed_forward.1} parent=5 // pred_fallthru
        _
      %p794 = scmp.le.s32.totalorder 2, %s18
      // Predicated region
      $region65: #{feed_forward.1} parent=5 // pred_check
        %p795 = pneg %p794
      $region66: #{feed_forward.1} parent=5 // pred_check_branch
        %797 = sbr.rel (%p795) target = $region68
      $region67: #{feed_forward.1} parent=5 // pred_region
        %s798 = ssub.s32 %s18, 2
        // Predicated region
        $region69: #{feed_forward.1} parent=67 // pred_check
          %p799 = pneg %p184
        $region70: #{feed_forward.1} parent=67 // pred_check_branch
          %801 = sbr.rel (%p799) target = $region72
        $region71: #{feed_forward.1} parent=67 // pred_region
          %s802 = sand.u32 %s169, 1
          %s803 = scalar_lea.sflag [#allocation5], %s802
          %s804 = sand.u32 %s169, 1
          %s805 = smul.addr %s804, 8
          %s806 = scalar_lea.vmem [#allocation9], %s805
          %807 = dma.done %s803, 128
        $region72: #{feed_forward.1} parent=67 // pred_fallthru
          _
      $region68: #{feed_forward.1} parent=5 // pred_fallthru
        _
    $region6: #{feed_forward.1} parent=1 // loop_footer
      %s22 = sadd.s32 1, %s18
    $region7: #{feed_forward.1} parent=1 // loop_footer_branch
      %17 = sbr.rel target = $region3
    $region8: #{feed_forward.1} parent=1 // loop_exit
      _
    %808 = vsyncpa [#allocation4], 1
    %s809 = scalar_lea.sflag [#allocation4], 1
    %810 = vsyncpa %s809, 1
    %811 = vsyncpa [#allocation7], 1
    %812 = vsyncpa [#allocation5], 1
    %s813 = scalar_lea.sflag [#allocation5], 1
    %814 = vsyncpa %s813, 1

</llo_original>
